<compile_context>
chip_gen: v5e
topology: v5e:2x2
jax: 0.10.0
libtpu: 0.0.40
codegen_flags: <defaults>
</compile_context>

<pallas_src>
import functools

import jax
import jax.numpy as jnp
from jax.experimental import pallas as pl
from jax.experimental.pallas import tpu as pltpu

# ---------------- Colight model_config (small, self-consistent) ----------------
NUM_AGENTS    = 4                       # A
NUM_NEIGHBORS = 4                       # Nn
NUM_LANES     = 12
ACTION_N      = 5
NUM_ACTIONS   = ACTION_N - 1            # 4
MLP_LAYER     = [32, 16]                # MLP hidden sizes; last = dimension
DIMENSION     = MLP_LAYER[-1]           # 16
CNN_LAYER     = [[16, 32]]              # [[dv, dout]]  (single MHAM layer)
CNN_HEADS     = [8] * len(CNN_LAYER)    # nv per layer
DV            = CNN_LAYER[0][0]         # 16
NV            = CNN_HEADS[0]            # 8
DOUT          = CNN_LAYER[0][1]         # 32
F_IN          = NUM_LANES + NUM_ACTIONS # 16
H1            = MLP_LAYER[0]            # 32
DHEAD         = DV * NV                 # 128 == one full lane width

assert DIMENSION == F_IN, "torch module requires mlp_layer[-1] == num_lanes + num_actions"


def _round_up(x, m):
    return ((x + m - 1) // m) * m


# ------------------------------- Pallas kernel ---------------------------------
def _colight_kernel(agent_ref, adj_ref, l1_ref, l2_ref, lh_ref, lo_ref, lq_ref,
                    q_ref, *, bt):
    relu = lambda t: jnp.maximum(t, 0.0)
    dot = lambda a, b: jnp.dot(a, b, preferred_element_type=jnp.float32)

    # packed weight slabs: last row is the bias
    l1 = l1_ref[...]                                     # (F_IN+1, H1)
    l2 = l2_ref[...]                                     # (H1+1, DIM)
    lh = lh_ref[...]                                     # (DIM+1, DHEAD)
    lo = lo_ref[...]                                     # (DHEAD+1, DOUT)   (head-mean folded in)
    lq = lq_ref[...]                                     # (DOUT+1, NUM_ACTIONS)

    # ---- MLP over all (agent, sample) rows of the tile (agent-major rows) ----
    x = agent_ref[...].reshape(NUM_AGENTS * bt, F_IN)    # (A*bt, F_IN)
    x = relu(dot(x, l1[:F_IN]) + l1[F_IN:])              # (A*bt, H1)
    x = relu(dot(x, l2[:H1]) + l2[H1:])                  # (A*bt, DIM)

    # ---- neighbor-hidden head projection of every source agent (bias later) ----
    y = dot(x, lh[:DIMENSION])                           # (A*bt, DHEAD=128)
    bh = lh[DIMENSION:]                                  # (1, DHEAD)
    ys = [y[m * bt:(m + 1) * bt, :] for m in range(NUM_AGENTS)]   # per-source-agent slabs

    adj0 = adj_ref[...]                                  # (bt, Nn*A)  — adjacency of agent 0

    # ---- neighbor aggregation for agent 0 (attention is provably identity) ----
    acc = jnp.zeros((bt, DHEAD), jnp.float32)
    for n in range(NUM_NEIGHBORS):
        z = jnp.zeros((bt, DHEAD), jnp.float32)
        for m in range(NUM_AGENTS):
            c = adj0[:, n * NUM_AGENTS + m:n * NUM_AGENTS + m + 1]   # (bt, 1)
            z = z + c * ys[m]                                        # VPU broadcast-MAC
        acc = acc + relu(z + bh)                         # relu(neighbor_hidden_repr_head)

    # ---- head-mean + MHAM out layer (folded) -> Colight out layer ----
    out = relu(dot(acc, lo[:DHEAD]) + lo[DHEAD:])        # (bt, DOUT)
    q = dot(out, lq[:DOUT]) + lq[DOUT:]                  # (bt, NUM_ACTIONS)
    q_ref[...] = q


# --------------------------------- wrapper --------------------------------------
def colight_forward(agent, adj, kernel_params, block_b=512):
    """agent: (B, A, F_IN), adj: (B, A, Nn, A).  Returns (B, NUM_ACTIONS)."""
    assert block_b % 8 == 0
    B = agent.shape[0]
    bt = block_b if B >= block_b else _round_up(max(B, 1), 8)
    Bp = _round_up(B, bt)
    pad = Bp - B

    # only agent 0's Q-values are returned -> only agent 0's adjacency is needed
    adj0 = adj[:, 0, :, :].reshape(B, NUM_NEIGHBORS * NUM_AGENTS)
    if pad:
        agent = jnp.pad(agent, ((0, pad), (0, 0), (0, 0)))
        adj0 = jnp.pad(adj0, ((0, pad), (0, 0)))

    # agent-major layout (A, Bp, F_IN): per-source-agent rows are contiguous in-kernel
    agent_t = jnp.transpose(agent, (1, 0, 2))

    n_tiles = Bp // bt
    in_specs = [
        pl.BlockSpec((NUM_AGENTS, bt, F_IN), lambda t: (0, t, 0)),          # agent (agent-major)
        pl.BlockSpec((bt, NUM_NEIGHBORS * NUM_AGENTS), lambda t: (t, 0)),   # adjacency of agent 0
        pl.BlockSpec((F_IN + 1, H1), lambda t: (0, 0)),                     # MLP layer 1 (+bias row)
        pl.BlockSpec((H1 + 1, DIMENSION), lambda t: (0, 0)),                # MLP layer 2 (+bias row)
        pl.BlockSpec((DIMENSION + 1, DHEAD), lambda t: (0, 0)),             # fused head weights (+bias)
        pl.BlockSpec((DHEAD + 1, DOUT), lambda t: (0, 0)),                  # head-mean ∘ Wo (+bias)
        pl.BlockSpec((DOUT + 1, NUM_ACTIONS), lambda t: (0, 0)),            # Colight out layer (+bias)
    ]
    out_spec = pl.BlockSpec((bt, NUM_ACTIONS), lambda t: (t, 0))

    q = pl.pallas_call(
        functools.partial(_colight_kernel, bt=bt),
        out_shape=jax.ShapeDtypeStruct((Bp, NUM_ACTIONS), jnp.float32),
        grid=(n_tiles,),
        in_specs=in_specs,
        out_specs=out_spec,
        compiler_params=pltpu.CompilerParams(dimension_semantics=("parallel",)),
    )(agent_t, adj0, *kernel_params)

    return q[:B]


# --------------------------- parameter construction ------------------------------
def init_params(key):
    ks = jax.random.split(key, 9)

    def lin(k, fin, fout):
        kw, kb = jax.random.split(k)
        w = jax.random.normal(kw, (fin, fout), jnp.float32) / jnp.sqrt(jnp.float32(fin))
        b = jax.random.normal(kb, (fout,), jnp.float32) * 0.01
        return w, b

    W1, b1 = lin(ks[0], F_IN, H1)
    W2, b2 = lin(ks[1], H1, DIMENSION)
    Wa, ba = lin(ks[2], DIMENSION, DHEAD)   # agent_head_hidden_layer            (dead: att == 1)
    Wn, bn = lin(ks[3], DIMENSION, DHEAD)   # neighbor_repr_head_hidden_layer    (dead: att == 1)
    Wh, bh = lin(ks[4], DIMENSION, DHEAD)   # neighbor_hidden_repr_head_hidden_layer
    Wo, bo = lin(ks[5], DV, DOUT)           # MHAM out_hidden_layer
    Wq, bq = lin(ks[6], DOUT, NUM_ACTIONS)  # Colight out_hidden_layer

    flat = (W1, b1, W2, b2, Wa, ba, Wn, bn, Wh, bh, Wo, bo, Wq, bq)

    # Fold head-mean (over nv) + Wo into one (DHEAD, DOUT) matrix:
    #   column j = d*NV + v of the head output maps to row d of Wo, scaled by 1/NV.
    Wfold = jnp.repeat(Wo, NV, axis=0) / NV                       # (DHEAD, DOUT), exact scale

    pack = lambda w, b: jnp.concatenate([w, b[None, :]], axis=0)  # bias as last row
    kernel_params = (
        pack(W1, b1),          # (F_IN+1, H1)
        pack(W2, b2),          # (H1+1, DIM)
        pack(Wh, bh),          # (DIM+1, DHEAD)
        pack(Wfold, bo),       # (DHEAD+1, DOUT)
        pack(Wq, bq),          # (DOUT+1, NUM_ACTIONS)
    )
    return flat, kernel_params


# -------------------- pure-JAX reference (op-for-op torch mirror) ----------------
def reference_forward(agent, adj, flat):
    (W1, b1, W2, b2, Wa, ba, Wn, bn, Wh, bh, Wo, bo, Wq, bq) = flat
    relu = jax.nn.relu
    B = agent.shape[0]

    x = relu(agent @ W1 + b1)
    x = relu(x @ W2 + b2)

    agent_repr = x.reshape(B, NUM_AGENTS, 1, DIMENSION)
    neighbor_repr = jnp.tile(x.reshape(B, 1, NUM_AGENTS, DIMENSION), (1, NUM_AGENTS, 1, 1))
    neighbor_repr = jnp.matmul(adj, neighbor_repr)                      # (B, A, Nn, DIM)

    arh = relu(agent_repr @ Wa + ba).reshape(B, NUM_AGENTS, 1, DV, NV).transpose(0, 1, 4, 2, 3)
    nrh = relu(neighbor_repr @ Wn + bn).reshape(B, NUM_AGENTS, NUM_NEIGHBORS, DV, NV).transpose(0, 1, 4, 2, 3)
    logits = jnp.einsum('bancd,baned->bance', arh, nrh)
    att = jax.nn.softmax(logits, axis=3)                                # singleton axis -> att == 1
    nhrh = relu(neighbor_repr @ Wh + bh).reshape(B, NUM_AGENTS, NUM_NEIGHBORS, DV, NV).transpose(0, 1, 4, 2, 3)
    out = jnp.mean(jnp.matmul(att, nhrh), axis=2).reshape(B, NUM_AGENTS, DV)
    out = relu(out @ Wo + bo)
    q = out @ Wq + bq
    return q[:, 0, :]


# ------------------------------------- main --------------------------------------
if __name__ == "__main__":
    key = jax.random.PRNGKey(0)
    k_agent, k_adj, k_par = jax.random.split(key, 3)

    flat_params, kernel_params = init_params(k_par)

    # small smoke test (single tile, padded batch)
    B = 2
    agent = jax.random.normal(k_agent, (B, NUM_AGENTS, F_IN), jnp.float32)
    adj = jax.random.uniform(k_adj, (B, NUM_AGENTS, NUM_NEIGHBORS, NUM_AGENTS), jnp.float32)

    out = jax.block_until_ready(colight_forward(agent, adj, kernel_params))
    ref = reference_forward(agent, adj, flat_params)
    assert out.shape == (B, NUM_ACTIONS)
    if not bool(jnp.allclose(out, ref, atol=1e-4, rtol=1e-4)):
        raise AssertionError("Pallas kernel output does not match reference (small batch)")

    # larger batch: exercises multi-tile grid + batch padding
    B2 = 300
    agent2 = jax.random.normal(jax.random.PRNGKey(1), (B2, NUM_AGENTS, F_IN), jnp.float32)
    adj2 = jax.random.uniform(jax.random.PRNGKey(2), (B2, NUM_AGENTS, NUM_NEIGHBORS, NUM_AGENTS),
                              jnp.float32)
    out2 = jax.block_until_ready(colight_forward(agent2, adj2, kernel_params, block_b=128))
    ref2 = reference_forward(agent2, adj2, flat_params)
    assert out2.shape == (B2, NUM_ACTIONS)
    if not bool(jnp.allclose(out2, ref2, atol=1e-4, rtol=1e-4)):
        raise AssertionError("Pallas kernel output does not match reference (tiled batch)")

    print("KERNEL_OK")
</pallas_src>

<mosaic_0001>
module attributes {stable_mosaic.version = 11 : i64} {
  func.func @_colight_kernel(%arg0: i32, %arg1: memref<4x8x16xf32, #tpu.memory_space<vmem>>, %arg2: memref<8x16xf32, #tpu.memory_space<vmem>>, %arg3: memref<17x32xf32, #tpu.memory_space<vmem>>, %arg4: memref<33x16xf32, #tpu.memory_space<vmem>>, %arg5: memref<17x128xf32, #tpu.memory_space<vmem>>, %arg6: memref<129x32xf32, #tpu.memory_space<vmem>>, %arg7: memref<33x4xf32, #tpu.memory_space<vmem>>, %arg8: memref<8x4xf32, #tpu.memory_space<vmem>>) attributes {dimension_semantics = [#tpu.dimension_semantics<parallel>], iteration_bounds = array<i64: 1>, scalar_prefetch = 0 : i64, scratch_operands = 0 : i64, tpu.core_type = #tpu.core_type<tc>, window_params = [{transform_indices = @transform_0, window_bounds = array<i64: 4, 8, 16>}, {transform_indices = @transform_1, window_bounds = array<i64: 8, 16>}, {pipeline_mode = #tpu.pipeline_mode<synchronous>, transform_indices = @transform_2, window_bounds = array<i64: 17, 32>}, {pipeline_mode = #tpu.pipeline_mode<synchronous>, transform_indices = @transform_3, window_bounds = array<i64: 33, 16>}, {pipeline_mode = #tpu.pipeline_mode<synchronous>, transform_indices = @transform_4, window_bounds = array<i64: 17, 128>}, {pipeline_mode = #tpu.pipeline_mode<synchronous>, transform_indices = @transform_5, window_bounds = array<i64: 129, 32>}, {pipeline_mode = #tpu.pipeline_mode<synchronous>, transform_indices = @transform_6, window_bounds = array<i64: 33, 4>}, {transform_indices = @transform_7, window_bounds = array<i64: 8, 4>}]} {
    %c0 = arith.constant 0 : index
    %c0_0 = arith.constant 0 : index
    %0 = vector.load %arg3[%c0, %c0_0] : memref<17x32xf32, #tpu.memory_space<vmem>>, vector<17x32xf32>
    %c0_1 = arith.constant 0 : index
    %c0_2 = arith.constant 0 : index
    %1 = vector.load %arg4[%c0_1, %c0_2] : memref<33x16xf32, #tpu.memory_space<vmem>>, vector<33x16xf32>
    %c0_3 = arith.constant 0 : index
    %c0_4 = arith.constant 0 : index
    %2 = vector.load %arg5[%c0_3, %c0_4] : memref<17x128xf32, #tpu.memory_space<vmem>>, vector<17x128xf32>
    %c0_5 = arith.constant 0 : index
    %c0_6 = arith.constant 0 : index
    %3 = vector.load %arg6[%c0_5, %c0_6] : memref<129x32xf32, #tpu.memory_space<vmem>>, vector<129x32xf32>
    %c0_7 = arith.constant 0 : index
    %c0_8 = arith.constant 0 : index
    %4 = vector.load %arg7[%c0_7, %c0_8] : memref<33x4xf32, #tpu.memory_space<vmem>>, vector<33x4xf32>
    %c0_9 = arith.constant 0 : index
    %c0_10 = arith.constant 0 : index
    %c0_11 = arith.constant 0 : index
    %5 = vector.load %arg1[%c0_9, %c0_10, %c0_11] : memref<4x8x16xf32, #tpu.memory_space<vmem>>, vector<4x8x16xf32>
    %6 = vector.shape_cast %5 : vector<4x8x16xf32> to vector<32x16xf32>
    %7 = vector.extract_strided_slice %0 {offsets = [0, 0], sizes = [16, 32], strides = [1, 1]} : vector<17x32xf32> to vector<16x32xf32>
    %cst = arith.constant dense<0.000000e+00> : vector<32x32xf32>
    %8 = tpu.matmul %6, %7, %cst {dimension_numbers = #tpu.dot_dimension_numbers<[1], [0], [0], [1], [0, 0, 1, 1], [], []>} : vector<32x16xf32>, vector<16x32xf32>, vector<32x32xf32> -> vector<32x32xf32>
    %9 = vector.extract_strided_slice %0 {offsets = [16, 0], sizes = [1, 32], strides = [1, 1]} : vector<17x32xf32> to vector<1x32xf32>
    %10 = vector.broadcast %9 : vector<1x32xf32> to vector<32x32xf32>
    %11 = arith.addf %8, %10 : vector<32x32xf32>
    %cst_12 = arith.constant 0.000000e+00 : f32
    %12 = vector.broadcast %cst_12 : f32 to vector<32x32xf32>
    %13 = arith.maximumf %11, %12 : vector<32x32xf32>
    %14 = vector.extract_strided_slice %1 {offsets = [0, 0], sizes = [32, 16], strides = [1, 1]} : vector<33x16xf32> to vector<32x16xf32>
    %cst_13 = arith.constant dense<0.000000e+00> : vector<32x16xf32>
    %15 = tpu.matmul %13, %14, %cst_13 {dimension_numbers = #tpu.dot_dimension_numbers<[1], [0], [0], [1], [0, 0, 1, 1], [], []>} : vector<32x32xf32>, vector<32x16xf32>, vector<32x16xf32> -> vector<32x16xf32>
    %16 = vector.extract_strided_slice %1 {offsets = [32, 0], sizes = [1, 16], strides = [1, 1]} : vector<33x16xf32> to vector<1x16xf32>
    %17 = vector.broadcast %16 : vector<1x16xf32> to vector<32x16xf32>
    %18 = arith.addf %15, %17 : vector<32x16xf32>
    %cst_14 = arith.constant 0.000000e+00 : f32
    %19 = vector.broadcast %cst_14 : f32 to vector<32x16xf32>
    %20 = arith.maximumf %18, %19 : vector<32x16xf32>
    %21 = vector.extract_strided_slice %2 {offsets = [0, 0], sizes = [16, 128], strides = [1, 1]} : vector<17x128xf32> to vector<16x128xf32>
    %cst_15 = arith.constant dense<0.000000e+00> : vector<32x128xf32>
    %22 = tpu.matmul %20, %21, %cst_15 {dimension_numbers = #tpu.dot_dimension_numbers<[1], [0], [0], [1], [0, 0, 1, 1], [], []>} : vector<32x16xf32>, vector<16x128xf32>, vector<32x128xf32> -> vector<32x128xf32>
    %23 = vector.extract_strided_slice %2 {offsets = [16, 0], sizes = [1, 128], strides = [1, 1]} : vector<17x128xf32> to vector<1x128xf32>
    %24 = vector.extract_strided_slice %22 {offsets = [0, 0], sizes = [8, 128], strides = [1, 1]} : vector<32x128xf32> to vector<8x128xf32>
    %25 = vector.extract_strided_slice %22 {offsets = [8, 0], sizes = [8, 128], strides = [1, 1]} : vector<32x128xf32> to vector<8x128xf32>
    %26 = vector.extract_strided_slice %22 {offsets = [16, 0], sizes = [8, 128], strides = [1, 1]} : vector<32x128xf32> to vector<8x128xf32>
    %27 = vector.extract_strided_slice %22 {offsets = [24, 0], sizes = [8, 128], strides = [1, 1]} : vector<32x128xf32> to vector<8x128xf32>
    %c0_16 = arith.constant 0 : index
    %c0_17 = arith.constant 0 : index
    %28 = vector.load %arg2[%c0_16, %c0_17] : memref<8x16xf32, #tpu.memory_space<vmem>>, vector<8x16xf32>
    %cst_18 = arith.constant 0.000000e+00 : f32
    %29 = vector.broadcast %cst_18 : f32 to vector<8x128xf32>
    %cst_19 = arith.constant 0.000000e+00 : f32
    %30 = vector.broadcast %cst_19 : f32 to vector<8x128xf32>
    %31 = vector.extract_strided_slice %28 {offsets = [0, 0], sizes = [8, 1], strides = [1, 1]} : vector<8x16xf32> to vector<8x1xf32>
    %32 = vector.broadcast %31 : vector<8x1xf32> to vector<8x128xf32>
    %33 = arith.mulf %32, %24 : vector<8x128xf32>
    %34 = arith.addf %30, %33 : vector<8x128xf32>
    %35 = vector.extract_strided_slice %28 {offsets = [0, 1], sizes = [8, 1], strides = [1, 1]} : vector<8x16xf32> to vector<8x1xf32>
    %36 = vector.broadcast %35 : vector<8x1xf32> to vector<8x128xf32>
    %37 = arith.mulf %36, %25 : vector<8x128xf32>
    %38 = arith.addf %34, %37 : vector<8x128xf32>
    %39 = vector.extract_strided_slice %28 {offsets = [0, 2], sizes = [8, 1], strides = [1, 1]} : vector<8x16xf32> to vector<8x1xf32>
    %40 = vector.broadcast %39 : vector<8x1xf32> to vector<8x128xf32>
    %41 = arith.mulf %40, %26 : vector<8x128xf32>
    %42 = arith.addf %38, %41 : vector<8x128xf32>
    %43 = vector.extract_strided_slice %28 {offsets = [0, 3], sizes = [8, 1], strides = [1, 1]} : vector<8x16xf32> to vector<8x1xf32>
    %44 = vector.broadcast %43 : vector<8x1xf32> to vector<8x128xf32>
    %45 = arith.mulf %44, %27 : vector<8x128xf32>
    %46 = arith.addf %42, %45 : vector<8x128xf32>
    %47 = vector.broadcast %23 : vector<1x128xf32> to vector<8x128xf32>
    %48 = arith.addf %46, %47 : vector<8x128xf32>
    %cst_20 = arith.constant 0.000000e+00 : f32
    %49 = vector.broadcast %cst_20 : f32 to vector<8x128xf32>
    %50 = arith.maximumf %48, %49 : vector<8x128xf32>
    %51 = arith.addf %29, %50 : vector<8x128xf32>
    %cst_21 = arith.constant 0.000000e+00 : f32
    %52 = vector.broadcast %cst_21 : f32 to vector<8x128xf32>
    %53 = vector.extract_strided_slice %28 {offsets = [0, 4], sizes = [8, 1], strides = [1, 1]} : vector<8x16xf32> to vector<8x1xf32>
    %54 = vector.broadcast %53 : vector<8x1xf32> to vector<8x128xf32>
    %55 = arith.mulf %54, %24 : vector<8x128xf32>
    %56 = arith.addf %52, %55 : vector<8x128xf32>
    %57 = vector.extract_strided_slice %28 {offsets = [0, 5], sizes = [8, 1], strides = [1, 1]} : vector<8x16xf32> to vector<8x1xf32>
    %58 = vector.broadcast %57 : vector<8x1xf32> to vector<8x128xf32>
    %59 = arith.mulf %58, %25 : vector<8x128xf32>
    %60 = arith.addf %56, %59 : vector<8x128xf32>
    %61 = vector.extract_strided_slice %28 {offsets = [0, 6], sizes = [8, 1], strides = [1, 1]} : vector<8x16xf32> to vector<8x1xf32>
    %62 = vector.broadcast %61 : vector<8x1xf32> to vector<8x128xf32>
    %63 = arith.mulf %62, %26 : vector<8x128xf32>
    %64 = arith.addf %60, %63 : vector<8x128xf32>
    %65 = vector.extract_strided_slice %28 {offsets = [0, 7], sizes = [8, 1], strides = [1, 1]} : vector<8x16xf32> to vector<8x1xf32>
    %66 = vector.broadcast %65 : vector<8x1xf32> to vector<8x128xf32>
    %67 = arith.mulf %66, %27 : vector<8x128xf32>
    %68 = arith.addf %64, %67 : vector<8x128xf32>
    %69 = vector.broadcast %23 : vector<1x128xf32> to vector<8x128xf32>
    %70 = arith.addf %68, %69 : vector<8x128xf32>
    %cst_22 = arith.constant 0.000000e+00 : f32
    %71 = vector.broadcast %cst_22 : f32 to vector<8x128xf32>
    %72 = arith.maximumf %70, %71 : vector<8x128xf32>
    %73 = arith.addf %51, %72 : vector<8x128xf32>
    %cst_23 = arith.constant 0.000000e+00 : f32
    %74 = vector.broadcast %cst_23 : f32 to vector<8x128xf32>
    %75 = vector.extract_strided_slice %28 {offsets = [0, 8], sizes = [8, 1], strides = [1, 1]} : vector<8x16xf32> to vector<8x1xf32>
    %76 = vector.broadcast %75 : vector<8x1xf32> to vector<8x128xf32>
    %77 = arith.mulf %76, %24 : vector<8x128xf32>
    %78 = arith.addf %74, %77 : vector<8x128xf32>
    %79 = vector.extract_strided_slice %28 {offsets = [0, 9], sizes = [8, 1], strides = [1, 1]} : vector<8x16xf32> to vector<8x1xf32>
    %80 = vector.broadcast %79 : vector<8x1xf32> to vector<8x128xf32>
    %81 = arith.mulf %80, %25 : vector<8x128xf32>
    %82 = arith.addf %78, %81 : vector<8x128xf32>
    %83 = vector.extract_strided_slice %28 {offsets = [0, 10], sizes = [8, 1], strides = [1, 1]} : vector<8x16xf32> to vector<8x1xf32>
    %84 = vector.broadcast %83 : vector<8x1xf32> to vector<8x128xf32>
    %85 = arith.mulf %84, %26 : vector<8x128xf32>
    %86 = arith.addf %82, %85 : vector<8x128xf32>
    %87 = vector.extract_strided_slice %28 {offsets = [0, 11], sizes = [8, 1], strides = [1, 1]} : vector<8x16xf32> to vector<8x1xf32>
    %88 = vector.broadcast %87 : vector<8x1xf32> to vector<8x128xf32>
    %89 = arith.mulf %88, %27 : vector<8x128xf32>
    %90 = arith.addf %86, %89 : vector<8x128xf32>
    %91 = vector.broadcast %23 : vector<1x128xf32> to vector<8x128xf32>
    %92 = arith.addf %90, %91 : vector<8x128xf32>
    %cst_24 = arith.constant 0.000000e+00 : f32
    %93 = vector.broadcast %cst_24 : f32 to vector<8x128xf32>
    %94 = arith.maximumf %92, %93 : vector<8x128xf32>
    %95 = arith.addf %73, %94 : vector<8x128xf32>
    %cst_25 = arith.constant 0.000000e+00 : f32
    %96 = vector.broadcast %cst_25 : f32 to vector<8x128xf32>
    %97 = vector.extract_strided_slice %28 {offsets = [0, 12], sizes = [8, 1], strides = [1, 1]} : vector<8x16xf32> to vector<8x1xf32>
    %98 = vector.broadcast %97 : vector<8x1xf32> to vector<8x128xf32>
    %99 = arith.mulf %98, %24 : vector<8x128xf32>
    %100 = arith.addf %96, %99 : vector<8x128xf32>
    %101 = vector.extract_strided_slice %28 {offsets = [0, 13], sizes = [8, 1], strides = [1, 1]} : vector<8x16xf32> to vector<8x1xf32>
    %102 = vector.broadcast %101 : vector<8x1xf32> to vector<8x128xf32>
    %103 = arith.mulf %102, %25 : vector<8x128xf32>
    %104 = arith.addf %100, %103 : vector<8x128xf32>
    %105 = vector.extract_strided_slice %28 {offsets = [0, 14], sizes = [8, 1], strides = [1, 1]} : vector<8x16xf32> to vector<8x1xf32>
    %106 = vector.broadcast %105 : vector<8x1xf32> to vector<8x128xf32>
    %107 = arith.mulf %106, %26 : vector<8x128xf32>
    %108 = arith.addf %104, %107 : vector<8x128xf32>
    %109 = vector.extract_strided_slice %28 {offsets = [0, 15], sizes = [8, 1], strides = [1, 1]} : vector<8x16xf32> to vector<8x1xf32>
    %110 = vector.broadcast %109 : vector<8x1xf32> to vector<8x128xf32>
    %111 = arith.mulf %110, %27 : vector<8x128xf32>
    %112 = arith.addf %108, %111 : vector<8x128xf32>
    %113 = vector.broadcast %23 : vector<1x128xf32> to vector<8x128xf32>
    %114 = arith.addf %112, %113 : vector<8x128xf32>
    %cst_26 = arith.constant 0.000000e+00 : f32
    %115 = vector.broadcast %cst_26 : f32 to vector<8x128xf32>
    %116 = arith.maximumf %114, %115 : vector<8x128xf32>
    %117 = arith.addf %95, %116 : vector<8x128xf32>
    %118 = vector.extract_strided_slice %3 {offsets = [0, 0], sizes = [128, 32], strides = [1, 1]} : vector<129x32xf32> to vector<128x32xf32>
    %cst_27 = arith.constant dense<0.000000e+00> : vector<8x32xf32>
    %119 = tpu.matmul %117, %118, %cst_27 {dimension_numbers = #tpu.dot_dimension_numbers<[1], [0], [0], [1], [0, 0, 1, 1], [], []>} : vector<8x128xf32>, vector<128x32xf32>, vector<8x32xf32> -> vector<8x32xf32>
    %120 = vector.extract_strided_slice %3 {offsets = [128, 0], sizes = [1, 32], strides = [1, 1]} : vector<129x32xf32> to vector<1x32xf32>
    %121 = vector.broadcast %120 : vector<1x32xf32> to vector<8x32xf32>
    %122 = arith.addf %119, %121 : vector<8x32xf32>
    %cst_28 = arith.constant 0.000000e+00 : f32
    %123 = vector.broadcast %cst_28 : f32 to vector<8x32xf32>
    %124 = arith.maximumf %122, %123 : vector<8x32xf32>
    %125 = vector.extract_strided_slice %4 {offsets = [0, 0], sizes = [32, 4], strides = [1, 1]} : vector<33x4xf32> to vector<32x4xf32>
    %cst_29 = arith.constant dense<0.000000e+00> : vector<8x4xf32>
    %126 = tpu.matmul %124, %125, %cst_29 {dimension_numbers = #tpu.dot_dimension_numbers<[1], [0], [0], [1], [0, 0, 1, 1], [], []>} : vector<8x32xf32>, vector<32x4xf32>, vector<8x4xf32> -> vector<8x4xf32>
    %127 = vector.extract_strided_slice %4 {offsets = [32, 0], sizes = [1, 4], strides = [1, 1]} : vector<33x4xf32> to vector<1x4xf32>
    %128 = vector.broadcast %127 : vector<1x4xf32> to vector<8x4xf32>
    %129 = arith.addf %126, %128 : vector<8x4xf32>
    %c0_30 = arith.constant 0 : index
    %c0_31 = arith.constant 0 : index
    %130 = vector.load %arg8[%c0_30, %c0_31] : memref<8x4xf32, #tpu.memory_space<vmem>>, vector<8x4xf32>
    tpu.vector_store %arg8[%c0_30, %c0_31], %129 {strides = array<i32>} : memref<8x4xf32, #tpu.memory_space<vmem>>, vector<8x4xf32>,
    return
  }
  func.func @transform_0(%arg0: i32) -> (i32, i32, i32) {
    %c0_i32 = arith.constant 0 : i32
    %c0_i32_0 = arith.constant 0 : i32
    %c0_i32_1 = arith.constant 0 : i32
    return %c0_i32, %arg0, %c0_i32_0 : i32, i32, i32
  }
  func.func @transform_1(%arg0: i32) -> (i32, i32) {
    %c0_i32 = arith.constant 0 : i32
    %c0_i32_0 = arith.constant 0 : i32
    return %arg0, %c0_i32 : i32, i32
  }
  func.func @transform_2(%arg0: i32) -> (i32, i32) {
    %c0_i32 = arith.constant 0 : i32
    %c0_i32_0 = arith.constant 0 : i32
    %c0_i32_1 = arith.constant 0 : i32
    return %c0_i32, %c0_i32_0 : i32, i32
  }
  func.func @transform_3(%arg0: i32) -> (i32, i32) {
    %c0_i32 = arith.constant 0 : i32
    %c0_i32_0 = arith.constant 0 : i32
    %c0_i32_1 = arith.constant 0 : i32
    return %c0_i32, %c0_i32_0 : i32, i32
  }
  func.func @transform_4(%arg0: i32) -> (i32, i32) {
    %c0_i32 = arith.constant 0 : i32
    %c0_i32_0 = arith.constant 0 : i32
    %c0_i32_1 = arith.constant 0 : i32
    return %c0_i32, %c0_i32_0 : i32, i32
  }
  func.func @transform_5(%arg0: i32) -> (i32, i32) {
    %c0_i32 = arith.constant 0 : i32
    %c0_i32_0 = arith.constant 0 : i32
    %c0_i32_1 = arith.constant 0 : i32
    return %c0_i32, %c0_i32_0 : i32, i32
  }
  func.func @transform_6(%arg0: i32) -> (i32, i32) {
    %c0_i32 = arith.constant 0 : i32
    %c0_i32_0 = arith.constant 0 : i32
    %c0_i32_1 = arith.constant 0 : i32
    return %c0_i32, %c0_i32_0 : i32, i32
  }
  func.func @transform_7(%arg0: i32) -> (i32, i32) {
    %c0_i32 = arith.constant 0 : i32
    %c0_i32_0 = arith.constant 0 : i32
    return %arg0, %c0_i32 : i32, i32
  }
}

</mosaic_0001>

<llo_original>
// kernel: tpu_custom_call.1
$region0: #{tpu_custom_call.1}
  #allocation0 [shape = 'u32[]', space=smem, size = 0x4, offset = 0x4, fixed_abs, tag = 'smem constant byte address 0x4 - core index']
  #allocation1 [shape = 'u32[72,128]{1,0:T(1,128)}', space=vmem, size = 0x9000, scoped, tag = 'internal scratch']
  %s0 = inlined_call_operand.vmem [shape: f32[4,8,16], index: 0, kind: input, shape index: {}]
  %s1 = inlined_call_operand.vmem [shape: f32[8,16], index: 1, kind: input, shape index: {}]
  %s2 = inlined_call_operand.vmem [shape: f32[17,32], index: 2, kind: input, shape index: {}]
  %s3 = inlined_call_operand.vmem [shape: f32[33,16], index: 3, kind: input, shape index: {}]
  %s4 = inlined_call_operand.vmem [shape: f32[17,128], index: 4, kind: input, shape index: {}]
  %s5 = inlined_call_operand.vmem [shape: f32[129,32], index: 5, kind: input, shape index: {}]
  %s6 = inlined_call_operand.vmem [shape: f32[33,4], index: 6, kind: input, shape index: {}]
  %s7 = inlined_call_operand.vmem [shape: f32[8,4], index: 7, kind: output, shape index: {}]
  %s8 = sld [smem:[#allocation0]]
  $region38: #{tpu_custom_call.1} parent=0
    _
  %s10 = ssub.s32 1, %s8
  %s11 = scalar_select 0, %s10, %s8
  // Predicated region
  $region2: #{tpu_custom_call.1} parent=0 // pred_check
    _
  $region3: #{tpu_custom_call.1} parent=0 // pred_check_branch
    %13 = sbr.rel (0) target = $region5
  $region4: #{tpu_custom_call.1} parent=0 // pred_region
    _
  $region5: #{tpu_custom_call.1} parent=0 // pred_fallthru
    _
  // Predicated region
  $region6: #{tpu_custom_call.1} parent=0 // pred_check
    _
  $region7: #{tpu_custom_call.1} parent=0 // pred_check_branch
    %15 = sbr.rel (0) target = $region9
  $region8: #{tpu_custom_call.1} parent=0 // pred_region
    _
  $region9: #{tpu_custom_call.1} parent=0 // pred_fallthru
    _
  // Predicated region
  $region10: #{tpu_custom_call.1} parent=0 // pred_check
    _
  $region11: #{tpu_custom_call.1} parent=0 // pred_check_branch
    %17 = sbr.rel (0) target = $region13
  $region12: #{tpu_custom_call.1} parent=0 // pred_region
    _
  $region13: #{tpu_custom_call.1} parent=0 // pred_fallthru
    _
  // Predicated region
  $region14: #{tpu_custom_call.1} parent=0 // pred_check
    _
  $region15: #{tpu_custom_call.1} parent=0 // pred_check_branch
    %19 = sbr.rel (0) target = $region17
  $region16: #{tpu_custom_call.1} parent=0 // pred_region
    _
  $region17: #{tpu_custom_call.1} parent=0 // pred_fallthru
    _
  // Predicated region
  $region18: #{tpu_custom_call.1} parent=0 // pred_check
    _
  $region19: #{tpu_custom_call.1} parent=0 // pred_check_branch
    %21 = sbr.rel (0) target = $region21
  $region20: #{tpu_custom_call.1} parent=0 // pred_region
    _
  $region21: #{tpu_custom_call.1} parent=0 // pred_fallthru
    _
  // Predicated region
  $region22: #{tpu_custom_call.1} parent=0 // pred_check
    _
  $region23: #{tpu_custom_call.1} parent=0 // pred_check_branch
    %23 = sbr.rel (0) target = $region25
  $region24: #{tpu_custom_call.1} parent=0 // pred_region
    _
  $region25: #{tpu_custom_call.1} parent=0 // pred_fallthru
    _
  // Predicated region
  $region26: #{tpu_custom_call.1} parent=0 // pred_check
    _
  $region27: #{tpu_custom_call.1} parent=0 // pred_check_branch
    %25 = sbr.rel (0) target = $region29
  $region28: #{tpu_custom_call.1} parent=0 // pred_region
    _
  $region29: #{tpu_custom_call.1} parent=0 // pred_fallthru
    _
  %v26 = vld [vmem:[%s2] sm:$0xff]
  %v27 = vld [vmem:[%s2 + $0x8] sm:$0xff]
  %v28 = vld [vmem:[%s2 + $0x10] sm:$0x1]
  %v29 = vld [vmem:[%s3] sm:$0xff]
  %v30 = vld [vmem:[%s3 + $0x8] sm:$0xff]
  %v31 = vld [vmem:[%s3 + $0x10] sm:$0xff]
  %v32 = vld [vmem:[%s3 + $0x18] sm:$0xff]
  %v33 = vld [vmem:[%s3 + $0x20] sm:$0x1]
  %v34 = vld [vmem:[%s4] sm:$0xff]
  %v35 = vld [vmem:[%s4 + $0x8] sm:$0xff]
  %v36 = vld [vmem:[%s4 + $0x10] sm:$0x1]
  %v37 = vld [vmem:[%s5] sm:$0xff]
  %v38 = vld [vmem:[%s5 + $0x8] sm:$0xff]
  %v39 = vld [vmem:[%s5 + $0x10] sm:$0xff]
  %v40 = vld [vmem:[%s5 + $0x18] sm:$0xff]
  %v41 = vld [vmem:[%s5 + $0x20] sm:$0xff]
  %v42 = vld [vmem:[%s5 + $0x28] sm:$0xff]
  %v43 = vld [vmem:[%s5 + $0x30] sm:$0xff]
  %v44 = vld [vmem:[%s5 + $0x38] sm:$0xff]
  %v45 = vld [vmem:[%s5 + $0x40] sm:$0xff]
  %v46 = vld [vmem:[%s5 + $0x48] sm:$0xff]
  %v47 = vld [vmem:[%s5 + $0x50] sm:$0xff]
  %v48 = vld [vmem:[%s5 + $0x58] sm:$0xff]
  %v49 = vld [vmem:[%s5 + $0x60] sm:$0xff]
  %v50 = vld [vmem:[%s5 + $0x68] sm:$0xff]
  %v51 = vld [vmem:[%s5 + $0x70] sm:$0xff]
  %v52 = vld [vmem:[%s5 + $0x78] sm:$0xff]
  %v53 = vld [vmem:[%s5 + $0x80] sm:$0x1]
  %v54 = vld [vmem:[%s6] sm:$0xff]
  %v55 = vld [vmem:[%s6 + $0x8] sm:$0xff]
  %v56 = vld [vmem:[%s6 + $0x10] sm:$0xff]
  %v57 = vld [vmem:[%s6 + $0x18] sm:$0xff]
  %v58 = vld [vmem:[%s6 + $0x20] sm:$0x1]
  %v59 = vld [vmem:[%s0] sm:$0xff]
  %v60 = vld [vmem:[%s0 + $0x8] sm:$0xff]
  %v61 = vld [vmem:[%s0 + $0x10] sm:$0xff]
  %v62 = vld [vmem:[%s0 + $0x18] sm:$0xff]
  %v63 = vperm.slane %v28, 0
  %vm64 = vcmask 130048
  %v66 = vsel %vm64, %v59, 0
  %v69 = vsel %vm64, %v60, 0
  %v72 = vsel %vm64, %v61, 0
  %v75 = vsel %vm64, %v62, 0
  %77 = vmatpush.msra.mxu0 0.0
  %78 = vmatpush.msra.mxu0 0.0
  %79 = vmatpush.msra.mxu0 0.0
  %80 = vmatpush.msra.mxu0 0.0
  %81 = vmatpush.msra.mxu0 0.0
  %82 = vmatpush.msra.mxu0 0.0
  %83 = vmatpush.msra.mxu0 0.0
  %84 = vmatpush.msra.mxu0 0.0
  %85 = vmatpush.msra.mxu0 0.0
  %86 = vmatpush.msra.mxu0 0.0
  %87 = vmatpush.msra.mxu0 0.0
  %88 = vmatpush.msra.mxu0 0.0
  %89 = vmatpush.msra.mxu0 0.0
  %90 = vmatpush.msra.mxu0 0.0
  %91 = vmatpush.msra.mxu0 %v27
  %92 = vmatpush.msra.mxu0 %v26
  %93 = vmatmul.f32.gmra.mxu0 %v66
  %v94 = vpop.f32.mrf.mxu0
  %v95 = vadd.f32 %v63, %v94
  %96 = vmatmul.f32.gmra.mxu0 %v69
  %v97 = vpop.f32.mrf.mxu0
  %v98 = vadd.f32 %v63, %v97
  %99 = vmatmul.f32.gmra.mxu0 %v72
  %v100 = vpop.f32.mrf.mxu0
  %v101 = vadd.f32 %v63, %v100
  %102 = vmatmul.f32.gmra.mxu0 %v75
  %v103 = vpop.f32.mrf.mxu0
  %v104 = vadd.f32 %v63, %v103
  %105 = vdwg.mxu0
  %v106 = vmax.f32 %v95, 0.0
  %v107 = vmax.f32 %v98, 0.0
  %v108 = vmax.f32 %v101, 0.0
  %v109 = vmax.f32 %v104, 0.0
  %v110 = vperm.slane %v33, 0
  %vm111 = vcmask 261120
  %v113 = vsel %vm111, %v106, 0
  %v116 = vsel %vm111, %v107, 0
  %v119 = vsel %vm111, %v108, 0
  %v122 = vsel %vm111, %v109, 0
  %124 = vmatpush.msra.mxu0 0.0
  %125 = vmatpush.msra.mxu0 0.0
  %126 = vmatpush.msra.mxu0 0.0
  %127 = vmatpush.msra.mxu0 0.0
  %128 = vmatpush.msra.mxu0 0.0
  %129 = vmatpush.msra.mxu0 0.0
  %130 = vmatpush.msra.mxu0 0.0
  %131 = vmatpush.msra.mxu0 0.0
  %132 = vmatpush.msra.mxu0 0.0
  %133 = vmatpush.msra.mxu0 0.0
  %134 = vmatpush.msra.mxu0 0.0
  %135 = vmatpush.msra.mxu0 0.0
  %136 = vmatpush.msra.mxu0 %v32
  %137 = vmatpush.msra.mxu0 %v31
  %138 = vmatpush.msra.mxu0 %v30
  %139 = vmatpush.msra.mxu0 %v29
  %140 = vmatmul.f32.gmra.mxu0 %v113
  %v141 = vpop.f32.mrf.mxu0
  %v142 = vadd.f32 %v110, %v141
  %143 = vmatmul.f32.gmra.mxu0 %v116
  %v144 = vpop.f32.mrf.mxu0
  %v145 = vadd.f32 %v110, %v144
  %146 = vmatmul.f32.gmra.mxu0 %v119
  %v147 = vpop.f32.mrf.mxu0
  %v148 = vadd.f32 %v110, %v147
  %149 = vmatmul.f32.gmra.mxu0 %v122
  %v150 = vpop.f32.mrf.mxu0
  %v151 = vadd.f32 %v110, %v150
  %152 = vdwg.mxu0
  %v153 = vmax.f32 %v142, 0.0
  %v154 = vmax.f32 %v145, 0.0
  %v155 = vmax.f32 %v148, 0.0
  %v156 = vmax.f32 %v151, 0.0
  %v158 = vsel %vm64, %v153, 0
  %v161 = vsel %vm64, %v154, 0
  %v164 = vsel %vm64, %v155, 0
  %v167 = vsel %vm64, %v156, 0
  %169 = vmatpush.msra.mxu0 0.0
  %170 = vmatpush.msra.mxu0 0.0
  %171 = vmatpush.msra.mxu0 0.0
  %172 = vmatpush.msra.mxu0 0.0
  %173 = vmatpush.msra.mxu0 0.0
  %174 = vmatpush.msra.mxu0 0.0
  %175 = vmatpush.msra.mxu0 0.0
  %176 = vmatpush.msra.mxu0 0.0
  %177 = vmatpush.msra.mxu0 0.0
  %178 = vmatpush.msra.mxu0 0.0
  %179 = vmatpush.msra.mxu0 0.0
  %180 = vmatpush.msra.mxu0 0.0
  %181 = vmatpush.msra.mxu0 0.0
  %182 = vmatpush.msra.mxu0 0.0
  %183 = vmatpush.msra.mxu0 %v35
  %184 = vmatpush.msra.mxu0 %v34
  %185 = vmatmul.f32.gmra.mxu0 %v158
  %v186 = vpop.f32.mrf.mxu0
  %v187 = vadd.f32 0.0, %v186
  %188 = vmatmul.f32.gmra.mxu0 %v161
  %v189 = vpop.f32.mrf.mxu0
  %v190 = vadd.f32 0.0, %v189
  %191 = vmatmul.f32.gmra.mxu0 %v164
  %v192 = vpop.f32.mrf.mxu0
  %v193 = vadd.f32 0.0, %v192
  %194 = vmatmul.f32.gmra.mxu0 %v167
  %v195 = vpop.f32.mrf.mxu0
  %v196 = vadd.f32 0.0, %v195
  %197 = vdwg.mxu0
  %v198 = vld [vmem:[%s1] sm:$0xff]
  %200 = vset.pattern.permute.xlu0 0
  %201 = vperm.xlu0 %200, %v198
  %v202 = vpop.permute.xlu0 %201
  %v204 = vmul.f32 %v202, %v187
  %v205 = vadd.f32 %v204, 0.0
  %206 = vset.pattern.permute.xlu0 1
  %207 = vperm.xlu0 %206, %v198
  %v208 = vpop.permute.xlu0 %207
  %v210 = vmul.f32 %v208, %v190
  %v211 = vadd.f32 %v205, %v210
  %212 = vset.pattern.permute.xlu0 2
  %213 = vperm.xlu0 %212, %v198
  %v214 = vpop.permute.xlu0 %213
  %v216 = vmul.f32 %v214, %v193
  %v217 = vadd.f32 %v211, %v216
  %218 = vset.pattern.permute.xlu0 3
  %219 = vperm.xlu0 %218, %v198
  %v220 = vpop.permute.xlu0 %219
  %v222 = vmul.f32 %v220, %v196
  %v223 = vadd.f32 %v217, %v222
  %v224 = vperm.slane %v36, 0
  %v225 = vadd.f32 %v223, %v224
  %v226 = vmax.f32 %v225, 0.0
  %v227 = vadd.f32 %v226, 0.0
  %228 = vset.pattern.permute.xlu0 4
  %229 = vperm.xlu0 %228, %v198
  %v230 = vpop.permute.xlu0 %229
  %v232 = vmul.f32 %v230, %v187
  %v233 = vadd.f32 %v232, 0.0
  %234 = vset.pattern.permute.xlu0 5
  %235 = vperm.xlu0 %234, %v198
  %v236 = vpop.permute.xlu0 %235
  %v238 = vmul.f32 %v236, %v190
  %v239 = vadd.f32 %v233, %v238
  %240 = vset.pattern.permute.xlu0 6
  %241 = vperm.xlu0 %240, %v198
  %v242 = vpop.permute.xlu0 %241
  %v244 = vmul.f32 %v242, %v193
  %v245 = vadd.f32 %v239, %v244
  %246 = vset.pattern.permute.xlu0 7
  %247 = vperm.xlu0 %246, %v198
  %v248 = vpop.permute.xlu0 %247
  %v250 = vmul.f32 %v248, %v196
  %v251 = vadd.f32 %v245, %v250
  %v252 = vadd.f32 %v251, %v224
  %v253 = vmax.f32 %v252, 0.0
  %v254 = vadd.f32 %v227, %v253
  %255 = vset.pattern.permute.xlu0 8
  %256 = vperm.xlu0 %255, %v198
  %v257 = vpop.permute.xlu0 %256
  %v259 = vmul.f32 %v257, %v187
  %v260 = vadd.f32 %v259, 0.0
  %261 = vset.pattern.permute.xlu0 9
  %262 = vperm.xlu0 %261, %v198
  %v263 = vpop.permute.xlu0 %262
  %v265 = vmul.f32 %v263, %v190
  %v266 = vadd.f32 %v260, %v265
  %267 = vset.pattern.permute.xlu0 10
  %268 = vperm.xlu0 %267, %v198
  %v269 = vpop.permute.xlu0 %268
  %v271 = vmul.f32 %v269, %v193
  %v272 = vadd.f32 %v266, %v271
  %273 = vset.pattern.permute.xlu0 11
  %274 = vperm.xlu0 %273, %v198
  %v275 = vpop.permute.xlu0 %274
  %v277 = vmul.f32 %v275, %v196
  %v278 = vadd.f32 %v272, %v277
  %v279 = vadd.f32 %v278, %v224
  %v280 = vmax.f32 %v279, 0.0
  %v281 = vadd.f32 %v254, %v280
  %282 = vset.pattern.permute.xlu0 12
  %283 = vperm.xlu0 %282, %v198
  %v284 = vpop.permute.xlu0 %283
  %v286 = vmul.f32 %v284, %v187
  %v287 = vadd.f32 %v286, 0.0
  %288 = vset.pattern.permute.xlu0 13
  %289 = vperm.xlu0 %288, %v198
  %v290 = vpop.permute.xlu0 %289
  %v292 = vmul.f32 %v290, %v190
  %v293 = vadd.f32 %v287, %v292
  %294 = vset.pattern.permute.xlu0 14
  %295 = vperm.xlu0 %294, %v198
  %v296 = vpop.permute.xlu0 %295
  %v298 = vmul.f32 %v296, %v193
  %v299 = vadd.f32 %v293, %v298
  %300 = vset.pattern.permute.xlu0 15
  %301 = vperm.xlu0 %300, %v198
  %v302 = vpop.permute.xlu0 %301
  %v304 = vmul.f32 %v302, %v196
  %v305 = vadd.f32 %v299, %v304
  %v306 = vadd.f32 %v305, %v224
  %v307 = vmax.f32 %v306, 0.0
  %v308 = vadd.f32 %v281, %v307
  %v309 = vperm.slane %v53, 0
  %310 = vmatpush.msra.mxu0 %v52
  %311 = vmatpush.msra.mxu0 %v51
  %312 = vmatpush.msra.mxu0 %v50
  %313 = vmatpush.msra.mxu0 %v49
  %314 = vmatpush.msra.mxu0 %v48
  %315 = vmatpush.msra.mxu0 %v47
  %316 = vmatpush.msra.mxu0 %v46
  %317 = vmatpush.msra.mxu0 %v45
  %318 = vmatpush.msra.mxu0 %v44
  %319 = vmatpush.msra.mxu0 %v43
  %320 = vmatpush.msra.mxu0 %v42
  %321 = vmatpush.msra.mxu0 %v41
  %322 = vmatpush.msra.mxu0 %v40
  %323 = vmatpush.msra.mxu0 %v39
  %324 = vmatpush.msra.mxu0 %v38
  %325 = vmatpush.msra.mxu0 %v37
  %326 = vmatmul.f32.gmra.mxu0 %v308
  %v327 = vpop.f32.mrf.mxu0
  %v328 = vadd.f32 %v309, %v327
  %329 = vdwg.mxu0
  %v330 = vmax.f32 %v328, 0.0
  %v331 = vperm.slane %v58, 0
  %v333 = vsel %vm111, %v330, 0
  %335 = vmatpush.msra.mxu0 0.0
  %336 = vmatpush.msra.mxu0 0.0
  %337 = vmatpush.msra.mxu0 0.0
  %338 = vmatpush.msra.mxu0 0.0
  %339 = vmatpush.msra.mxu0 0.0
  %340 = vmatpush.msra.mxu0 0.0
  %341 = vmatpush.msra.mxu0 0.0
  %342 = vmatpush.msra.mxu0 0.0
  %343 = vmatpush.msra.mxu0 0.0
  %344 = vmatpush.msra.mxu0 0.0
  %345 = vmatpush.msra.mxu0 0.0
  %346 = vmatpush.msra.mxu0 0.0
  %347 = vmatpush.msra.mxu0 %v57
  %348 = vmatpush.msra.mxu0 %v56
  %349 = vmatpush.msra.mxu0 %v55
  %350 = vmatpush.msra.mxu0 %v54
  %351 = vmatmul.f32.gmra.mxu0 %v333
  %v352 = vpop.f32.mrf.mxu0
  %v353 = vadd.f32 %v331, %v352
  %354 = vdwg.mxu0
  %vm355 = vcmask 31744
  %356 = vst.msk [vmem:[%s7] sm:$0xff] %vm355, %v353
  // Predicated region
  $region30: #{tpu_custom_call.1} parent=0 // pred_check
    _
  $region31: #{tpu_custom_call.1} parent=0 // pred_check_branch
    %358 = sbr.rel (0) target = $region33
  $region32: #{tpu_custom_call.1} parent=0 // pred_region
    _
  $region33: #{tpu_custom_call.1} parent=0 // pred_fallthru
    _
  // Predicated region
  $region34: #{tpu_custom_call.1} parent=0 // pred_check
    _
  $region35: #{tpu_custom_call.1} parent=0 // pred_check_branch
    %360 = sbr.rel (0) target = $region37
  $region36: #{tpu_custom_call.1} parent=0 // pred_region
    _
  $region37: #{tpu_custom_call.1} parent=0 // pred_fallthru
    _

</llo_original>
